<compile_context>
chip_gen: v6e
topology: v6e:2x2x1
jax: 0.10.0
libtpu: 0.0.40
codegen_flags: <defaults>
</compile_context>

<pallas_src>
import functools
import numpy as np
import jax
import jax.numpy as jnp
from jax.experimental import pallas as pl
from jax.experimental.pallas import tpu as pltpu


def _basic_block_kernel(x_ref, w1_ref, b1_ref, w2_ref, b2_ref, out_ref,
                        buf_ref, patch_ref, *, H, W):
    # x_ref:     (1, C, H*W)   f32  one image, channel-major, spatial flattened on lanes
    # w1_ref:    (C, 9*C)      bf16 conv1 weights (BN1 scale folded in), tap-major along K
    # b1_ref:    (C, 1)        f32  folded BN1 bias
    # w2_ref:    (C, 9*C)      bf16 conv2 weights (BN2 scale folded in)
    # b2_ref:    (C, 1)        f32  folded BN2 bias
    # out_ref:   (1, C, H*W)   f32
    # buf_ref:   (C, (W+1) + H*W + (W+1)) f32  flat activation buffer with zero halo lanes
    # patch_ref: (9*C, H*W)    f32  im2col patches (9 taps stacked along K)
    C = x_ref.shape[1]
    HW = H * W
    P = W + 1                                  # halo width on each side of the flat buffer

    # Zero only the halo ring; the interior is always fully overwritten.
    buf_ref[:, :P] = jnp.zeros((C, P), jnp.float32)
    buf_ref[:, P + HW:] = jnp.zeros((C, P), jnp.float32)

    # Column coordinate of every flattened pixel (masks the dx=+/-1 row-wrap taps).
    xcol = jax.lax.broadcasted_iota(jnp.int32, (1, HW), 1) % W

    def conv3x3(a2d, w_ref, b_ref):
        # a2d: (C, HW) f32 input. Returns conv + folded-BN output, (C, HW) f32.
        buf_ref[:, P:P + HW] = a2d
        for t in range(9):
            dy, dx = t // 3 - 1, t % 3 - 1
            s = dy * W + dx
            # Static lane-shifted view; out-of-image rows read the zero halo.
            patch = buf_ref[:, P + s:P + s + HW]
            if dx != 0:
                ok = (xcol + dx >= 0) & (xcol + dx < W)
                patch = jnp.where(ok, patch, 0.0)
            patch_ref[t * C:(t + 1) * C, :] = patch
        # One fused-K MXU matmul: (C, 9C) x (9C, HW), bf16 operands, f32 accumulate.
        acc = jnp.dot(w_ref[...], patch_ref[...].astype(jnp.bfloat16),
                      preferred_element_type=jnp.float32)
        return acc + b_ref[...]                # per-channel folded BN bias

    x2d = x_ref[0]                                          # (C, HW) f32
    y = jnp.maximum(conv3x3(x2d, w1_ref, b1_ref), 0.0)      # conv1 + bn1 + relu
    z = conv3x3(y, w2_ref, b2_ref)                          # conv2 + bn2
    out_ref[0] = jnp.maximum(z + x2d, 0.0).astype(out_ref.dtype)   # + residual, relu


def _fold_bn(gamma, beta, mean, var, eps):
    scale = gamma / jnp.sqrt(var + eps)                     # (C,)
    bias = (beta - mean * scale).reshape(-1, 1)             # (C, 1)
    return scale.astype(jnp.float32), bias.astype(jnp.float32)


def _fold_weight(w_oihw, scale):
    # (Cout, Cin, 3, 3), scaled per out-channel by the BN scale -> (Cout, 9*Cin) tap-major, bf16.
    cout, cin = w_oihw.shape[0], w_oihw.shape[1]
    w = w_oihw.astype(jnp.float32) * scale[:, None, None, None]
    w = jnp.transpose(w, (0, 2, 3, 1)).reshape(cout, 9 * cin)
    return w.astype(jnp.bfloat16)


def basic_block_forward(x_nchw, params, eps=1e-5):
    """BasicBlock forward (stride=1, downsample=None, eval-mode BN). x_nchw: (N, C, H, W)."""
    N, C, H, W = x_nchw.shape
    Cout = params["w1"].shape[0]
    assert params["w1"].shape[1] == C and Cout == C, "downsample=None requires inplanes==planes"
    HW = H * W

    # NCHW flattens directly to the lane-dense (N, C, H*W) layout: no pad, no transpose.
    x2 = x_nchw.reshape(N, C, HW).astype(jnp.float32)

    s1, b1 = _fold_bn(params["g1"], params["b1"], params["m1"], params["v1"], eps)
    s2, b2 = _fold_bn(params["g2"], params["b2"], params["m2"], params["v2"], eps)
    w1m = _fold_weight(params["w1"], s1)
    w2m = _fold_weight(params["w2"], s2)

    kernel = functools.partial(_basic_block_kernel, H=H, W=W)
    out2 = pl.pallas_call(
        kernel,
        out_shape=jax.ShapeDtypeStruct((N, C, HW), jnp.float32),
        grid_spec=pltpu.PrefetchScalarGridSpec(
            num_scalar_prefetch=0,
            grid=(N,),
            in_specs=[
                pl.BlockSpec((1, C, HW), lambda n: (n, 0, 0)),       # activations (lane-dense)
                pl.BlockSpec((C, 9 * C), lambda n: (0, 0)),          # conv1 weights (bf16)
                pl.BlockSpec((C, 1), lambda n: (0, 0)),              # bn1 bias
                pl.BlockSpec((C, 9 * C), lambda n: (0, 0)),          # conv2 weights (bf16)
                pl.BlockSpec((C, 1), lambda n: (0, 0)),              # bn2 bias
            ],
            out_specs=pl.BlockSpec((1, C, HW), lambda n: (n, 0, 0)),
            scratch_shapes=[
                pltpu.VMEM((C, 2 * (W + 1) + HW), jnp.float32),      # flat halo buffer
                pltpu.VMEM((9 * C, HW), jnp.float32),                # im2col patches
            ],
        ),
        compiler_params=pltpu.CompilerParams(
            dimension_semantics=("parallel",),        # batch axis: megacore-shardable on v7x
            vmem_limit_bytes=32 * 1024 * 1024,        # explicit budget (actual use ~100 KiB)
        ),
    )(x2, w1m, b1, w2m, b2)

    return out2.reshape(N, C, H, W)


def basic_block_reference(x, params, eps=1e-5):
    """Pure-JAX NCHW f32 reference matching the PyTorch module (eval-mode BN)."""
    def conv(inp, w):
        return jax.lax.conv_general_dilated(
            inp, w, window_strides=(1, 1), padding=((1, 1), (1, 1)),
            dimension_numbers=("NCHW", "OIHW", "NCHW"))

    def bn(inp, g, b, m, v):
        g, b, m, v = (a[None, :, None, None] for a in (g, b, m, v))
        return (inp - m) / jnp.sqrt(v + eps) * g + b

    out = jax.nn.relu(bn(conv(x, params["w1"]), params["g1"], params["b1"],
                         params["m1"], params["v1"]))
    out = bn(conv(out, params["w2"]), params["g2"], params["b2"],
             params["m2"], params["v2"])
    return jax.nn.relu(out + x)


if __name__ == "__main__":
    N, C, H, W = 2, 4, 16, 16          # inplanes = planes = 4, stride = 1, downsample = None
    key = jax.random.PRNGKey(0)
    ks = jax.random.split(key, 12)

    x = jax.random.normal(ks[0], (N, C, H, W), jnp.float32)
    params = {
        "w1": 0.1 * jax.random.normal(ks[1], (C, C, 3, 3), jnp.float32),
        "g1": 1.0 + 0.1 * jax.random.normal(ks[2], (C,), jnp.float32),
        "b1": 0.1 * jax.random.normal(ks[3], (C,), jnp.float32),
        "m1": 0.1 * jax.random.normal(ks[4], (C,), jnp.float32),
        "v1": 1.0 + 0.5 * jax.random.uniform(ks[5], (C,), jnp.float32),
        "w2": 0.1 * jax.random.normal(ks[6], (C, C, 3, 3), jnp.float32),
        "g2": 1.0 + 0.1 * jax.random.normal(ks[7], (C,), jnp.float32),
        "b2": 0.1 * jax.random.normal(ks[8], (C,), jnp.float32),
        "m2": 0.1 * jax.random.normal(ks[9], (C,), jnp.float32),
        "v2": 1.0 + 0.5 * jax.random.uniform(ks[10], (C,), jnp.float32),
    }

    out = basic_block_forward(x, params)
    jax.block_until_ready(out)

    ref = basic_block_reference(x, params)
    # Tolerance loosened vs. the f32 reference because the MXU operands are bf16
    # (f32 accumulation); observed error is well below this bound.
    np.testing.assert_allclose(np.asarray(out), np.asarray(ref), rtol=3e-2, atol=3e-2)

    print("KERNEL_OK")
</pallas_src>

<mosaic_0001>
module attributes {stable_mosaic.version = 11 : i64} {
  func.func @_basic_block_kernel(%arg0: i32, %arg1: memref<1x4x256xf32, #tpu.memory_space<vmem>>, %arg2: memref<4x36xbf16, #tpu.memory_space<vmem>>, %arg3: memref<4x1xf32, #tpu.memory_space<vmem>>, %arg4: memref<4x36xbf16, #tpu.memory_space<vmem>>, %arg5: memref<4x1xf32, #tpu.memory_space<vmem>>, %arg6: memref<1x4x256xf32, #tpu.memory_space<vmem>>, %arg7: memref<4x290xf32, #tpu.memory_space<vmem>>, %arg8: memref<36x256xf32, #tpu.memory_space<vmem>>) attributes {dimension_semantics = [#tpu.dimension_semantics<parallel>], iteration_bounds = array<i64: 2>, scalar_prefetch = 0 : i64, scratch_operands = 2 : i64, tpu.core_type = #tpu.core_type<tc>, window_params = [{transform_indices = @transform_0, window_bounds = array<i64: 1, 4, 256>}, {pipeline_mode = #tpu.pipeline_mode<synchronous>, transform_indices = @transform_1, window_bounds = array<i64: 4, 36>}, {pipeline_mode = #tpu.pipeline_mode<synchronous>, transform_indices = @transform_2, window_bounds = array<i64: 4, 1>}, {pipeline_mode = #tpu.pipeline_mode<synchronous>, transform_indices = @transform_3, window_bounds = array<i64: 4, 36>}, {pipeline_mode = #tpu.pipeline_mode<synchronous>, transform_indices = @transform_4, window_bounds = array<i64: 4, 1>}, {transform_indices = @transform_5, window_bounds = array<i64: 1, 4, 256>}]} {
    %cst = arith.constant 0.000000e+00 : f32
    %0 = vector.broadcast %cst : f32 to vector<4x17xf32>
    %c0 = arith.constant 0 : index
    %c0_0 = arith.constant 0 : index
    %1 = vector.load %arg7[%c0, %c0_0] : memref<4x290xf32, #tpu.memory_space<vmem>>, vector<4x17xf32>
    tpu.vector_store %arg7[%c0, %c0_0], %0 {strides = array<i32>} : memref<4x290xf32, #tpu.memory_space<vmem>>, vector<4x17xf32>,
    %cst_1 = arith.constant 0.000000e+00 : f32
    %2 = vector.broadcast %cst_1 : f32 to vector<4x17xf32>
    %c0_2 = arith.constant 0 : index
    %c273 = arith.constant 273 : index
    %3 = vector.load %arg7[%c0_2, %c273] : memref<4x290xf32, #tpu.memory_space<vmem>>, vector<4x17xf32>
    tpu.vector_store %arg7[%c0_2, %c273], %2 {strides = array<i32>} : memref<4x290xf32, #tpu.memory_space<vmem>>, vector<4x17xf32>,
    %4 = tpu.iota {dimensions = array<i32: 1>} : vector<1x256xi32>
    %c16_i32 = arith.constant 16 : i32
    %c0_i32 = arith.constant 0 : i32
    %5 = arith.cmpi eq, %c16_i32, %c0_i32 : i32
    %c1_i32 = arith.constant 1 : i32
    %6 = arith.select %5, %c1_i32, %c16_i32 : i32
    %7 = vector.broadcast %6 : i32 to vector<1x256xi32>
    %8 = arith.remsi %4, %7 : vector<1x256xi32>
    %c0_i32_3 = arith.constant 0 : i32
    %9 = vector.broadcast %c0_i32_3 : i32 to vector<1x256xi32>
    %10 = arith.cmpi ne, %8, %9 : vector<1x256xi32>
    %c0_i32_4 = arith.constant 0 : i32
    %11 = vector.broadcast %c0_i32_4 : i32 to vector<1x256xi32>
    %12 = arith.cmpi slt, %8, %11 : vector<1x256xi32>
    %c0_i32_5 = arith.constant 0 : i32
    %13 = arith.cmpi slt, %6, %c0_i32_5 : i32
    %14 = vector.broadcast %13 : i1 to vector<1x256xi1>
    %15 = vector.broadcast %14 : vector<1x256xi1> to vector<1x256xi1>
    %16 = arith.xori %12, %15 : vector<1x256xi1>
    %17 = arith.andi %16, %10 : vector<1x256xi1>
    %18 = vector.broadcast %6 : i32 to vector<1x256xi32>
    %19 = arith.addi %8, %18 : vector<1x256xi32>
    %20 = arith.select %17, %19, %8 : vector<1x256xi1>, vector<1x256xi32>
    %c0_6 = arith.constant 0 : index
    %c0_7 = arith.constant 0 : index
    %c0_8 = arith.constant 0 : index
    %21 = vector.load %arg1[%c0_6, %c0_7, %c0_8] : memref<1x4x256xf32, #tpu.memory_space<vmem>>, vector<1x4x256xf32>
    %22 = vector.shape_cast %21 : vector<1x4x256xf32> to vector<4x256xf32>
    %c0_9 = arith.constant 0 : index
    %c17 = arith.constant 17 : index
    %23 = vector.load %arg7[%c0_9, %c17] : memref<4x290xf32, #tpu.memory_space<vmem>>, vector<4x256xf32>
    tpu.vector_store %arg7[%c0_9, %c17], %22 {strides = array<i32>} : memref<4x290xf32, #tpu.memory_space<vmem>>, vector<4x256xf32>,
    %c0_10 = arith.constant 0 : index
    %c0_11 = arith.constant 0 : index
    %24 = vector.load %arg7[%c0_10, %c0_11] : memref<4x290xf32, #tpu.memory_space<vmem>>, vector<4x256xf32>
    %c-1_i32 = arith.constant -1 : i32
    %25 = vector.broadcast %c-1_i32 : i32 to vector<1x256xi32>
    %26 = arith.addi %20, %25 : vector<1x256xi32>
    %c0_i32_12 = arith.constant 0 : i32
    %27 = vector.broadcast %c0_i32_12 : i32 to vector<1x256xi32>
    %28 = arith.cmpi sge, %26, %27 : vector<1x256xi32>
    %c-1_i32_13 = arith.constant -1 : i32
    %29 = vector.broadcast %c-1_i32_13 : i32 to vector<1x256xi32>
    %30 = arith.addi %20, %29 : vector<1x256xi32>
    %c16_i32_14 = arith.constant 16 : i32
    %31 = vector.broadcast %c16_i32_14 : i32 to vector<1x256xi32>
    %32 = arith.cmpi slt, %30, %31 : vector<1x256xi32>
    %33 = arith.andi %28, %32 : vector<1x256xi1>
    %cst_15 = arith.constant 0.000000e+00 : f32
    %34 = vector.shape_cast %33 : vector<1x256xi1> to vector<1x256xi1>
    %35 = vector.broadcast %34 : vector<1x256xi1> to vector<4x256xi1>
    %36 = vector.broadcast %cst_15 : f32 to vector<4x256xf32>
    %37 = arith.select %35, %24, %36 : vector<4x256xi1>, vector<4x256xf32>
    %c0_16 = arith.constant 0 : index
    %c0_17 = arith.constant 0 : index
    %38 = vector.load %arg8[%c0_16, %c0_17] : memref<36x256xf32, #tpu.memory_space<vmem>>, vector<4x256xf32>
    tpu.vector_store %arg8[%c0_16, %c0_17], %37 {strides = array<i32>} : memref<36x256xf32, #tpu.memory_space<vmem>>, vector<4x256xf32>,
    %c0_18 = arith.constant 0 : index
    %c1 = arith.constant 1 : index
    %39 = vector.load %arg7[%c0_18, %c1] : memref<4x290xf32, #tpu.memory_space<vmem>>, vector<4x256xf32>
    %c4 = arith.constant 4 : index
    %c0_19 = arith.constant 0 : index
    %40 = vector.load %arg8[%c4, %c0_19] : memref<36x256xf32, #tpu.memory_space<vmem>>, vector<4x256xf32>
    tpu.vector_store %arg8[%c4, %c0_19], %39 {strides = array<i32>} : memref<36x256xf32, #tpu.memory_space<vmem>>, vector<4x256xf32>,
    %c0_20 = arith.constant 0 : index
    %c2 = arith.constant 2 : index
    %41 = vector.load %arg7[%c0_20, %c2] : memref<4x290xf32, #tpu.memory_space<vmem>>, vector<4x256xf32>
    %c1_i32_21 = arith.constant 1 : i32
    %42 = vector.broadcast %c1_i32_21 : i32 to vector<1x256xi32>
    %43 = arith.addi %20, %42 : vector<1x256xi32>
    %c0_i32_22 = arith.constant 0 : i32
    %44 = vector.broadcast %c0_i32_22 : i32 to vector<1x256xi32>
    %45 = arith.cmpi sge, %43, %44 : vector<1x256xi32>
    %c1_i32_23 = arith.constant 1 : i32
    %46 = vector.broadcast %c1_i32_23 : i32 to vector<1x256xi32>
    %47 = arith.addi %20, %46 : vector<1x256xi32>
    %c16_i32_24 = arith.constant 16 : i32
    %48 = vector.broadcast %c16_i32_24 : i32 to vector<1x256xi32>
    %49 = arith.cmpi slt, %47, %48 : vector<1x256xi32>
    %50 = arith.andi %45, %49 : vector<1x256xi1>
    %cst_25 = arith.constant 0.000000e+00 : f32
    %51 = vector.shape_cast %50 : vector<1x256xi1> to vector<1x256xi1>
    %52 = vector.broadcast %51 : vector<1x256xi1> to vector<4x256xi1>
    %53 = vector.broadcast %cst_25 : f32 to vector<4x256xf32>
    %54 = arith.select %52, %41, %53 : vector<4x256xi1>, vector<4x256xf32>
    %c8 = arith.constant 8 : index
    %c0_26 = arith.constant 0 : index
    %55 = vector.load %arg8[%c8, %c0_26] : memref<36x256xf32, #tpu.memory_space<vmem>>, vector<4x256xf32>
    tpu.vector_store %arg8[%c8, %c0_26], %54 {strides = array<i32>} : memref<36x256xf32, #tpu.memory_space<vmem>>, vector<4x256xf32>,
    %c0_27 = arith.constant 0 : index
    %c16 = arith.constant 16 : index
    %56 = vector.load %arg7[%c0_27, %c16] : memref<4x290xf32, #tpu.memory_space<vmem>>, vector<4x256xf32>
    %c-1_i32_28 = arith.constant -1 : i32
    %57 = vector.broadcast %c-1_i32_28 : i32 to vector<1x256xi32>
    %58 = arith.addi %20, %57 : vector<1x256xi32>
    %c0_i32_29 = arith.constant 0 : i32
    %59 = vector.broadcast %c0_i32_29 : i32 to vector<1x256xi32>
    %60 = arith.cmpi sge, %58, %59 : vector<1x256xi32>
    %c-1_i32_30 = arith.constant -1 : i32
    %61 = vector.broadcast %c-1_i32_30 : i32 to vector<1x256xi32>
    %62 = arith.addi %20, %61 : vector<1x256xi32>
    %c16_i32_31 = arith.constant 16 : i32
    %63 = vector.broadcast %c16_i32_31 : i32 to vector<1x256xi32>
    %64 = arith.cmpi slt, %62, %63 : vector<1x256xi32>
    %65 = arith.andi %60, %64 : vector<1x256xi1>
    %cst_32 = arith.constant 0.000000e+00 : f32
    %66 = vector.shape_cast %65 : vector<1x256xi1> to vector<1x256xi1>
    %67 = vector.broadcast %66 : vector<1x256xi1> to vector<4x256xi1>
    %68 = vector.broadcast %cst_32 : f32 to vector<4x256xf32>
    %69 = arith.select %67, %56, %68 : vector<4x256xi1>, vector<4x256xf32>
    %c12 = arith.constant 12 : index
    %c0_33 = arith.constant 0 : index
    %70 = vector.load %arg8[%c12, %c0_33] : memref<36x256xf32, #tpu.memory_space<vmem>>, vector<4x256xf32>
    tpu.vector_store %arg8[%c12, %c0_33], %69 {strides = array<i32>} : memref<36x256xf32, #tpu.memory_space<vmem>>, vector<4x256xf32>,
    %c0_34 = arith.constant 0 : index
    %c17_35 = arith.constant 17 : index
    %71 = vector.load %arg7[%c0_34, %c17_35] : memref<4x290xf32, #tpu.memory_space<vmem>>, vector<4x256xf32>
    %c16_36 = arith.constant 16 : index
    %c0_37 = arith.constant 0 : index
    %72 = vector.load %arg8[%c16_36, %c0_37] : memref<36x256xf32, #tpu.memory_space<vmem>>, vector<4x256xf32>
    tpu.vector_store %arg8[%c16_36, %c0_37], %71 {strides = array<i32>} : memref<36x256xf32, #tpu.memory_space<vmem>>, vector<4x256xf32>,
    %c0_38 = arith.constant 0 : index
    %c18 = arith.constant 18 : index
    %73 = vector.load %arg7[%c0_38, %c18] : memref<4x290xf32, #tpu.memory_space<vmem>>, vector<4x256xf32>
    %c1_i32_39 = arith.constant 1 : i32
    %74 = vector.broadcast %c1_i32_39 : i32 to vector<1x256xi32>
    %75 = arith.addi %20, %74 : vector<1x256xi32>
    %c0_i32_40 = arith.constant 0 : i32
    %76 = vector.broadcast %c0_i32_40 : i32 to vector<1x256xi32>
    %77 = arith.cmpi sge, %75, %76 : vector<1x256xi32>
    %c1_i32_41 = arith.constant 1 : i32
    %78 = vector.broadcast %c1_i32_41 : i32 to vector<1x256xi32>
    %79 = arith.addi %20, %78 : vector<1x256xi32>
    %c16_i32_42 = arith.constant 16 : i32
    %80 = vector.broadcast %c16_i32_42 : i32 to vector<1x256xi32>
    %81 = arith.cmpi slt, %79, %80 : vector<1x256xi32>
    %82 = arith.andi %77, %81 : vector<1x256xi1>
    %cst_43 = arith.constant 0.000000e+00 : f32
    %83 = vector.shape_cast %82 : vector<1x256xi1> to vector<1x256xi1>
    %84 = vector.broadcast %83 : vector<1x256xi1> to vector<4x256xi1>
    %85 = vector.broadcast %cst_43 : f32 to vector<4x256xf32>
    %86 = arith.select %84, %73, %85 : vector<4x256xi1>, vector<4x256xf32>
    %c20 = arith.constant 20 : index
    %c0_44 = arith.constant 0 : index
    %87 = vector.load %arg8[%c20, %c0_44] : memref<36x256xf32, #tpu.memory_space<vmem>>, vector<4x256xf32>
    tpu.vector_store %arg8[%c20, %c0_44], %86 {strides = array<i32>} : memref<36x256xf32, #tpu.memory_space<vmem>>, vector<4x256xf32>,
    %c0_45 = arith.constant 0 : index
    %c32 = arith.constant 32 : index
    %88 = vector.load %arg7[%c0_45, %c32] : memref<4x290xf32, #tpu.memory_space<vmem>>, vector<4x256xf32>
    %c-1_i32_46 = arith.constant -1 : i32
    %89 = vector.broadcast %c-1_i32_46 : i32 to vector<1x256xi32>
    %90 = arith.addi %20, %89 : vector<1x256xi32>
    %c0_i32_47 = arith.constant 0 : i32
    %91 = vector.broadcast %c0_i32_47 : i32 to vector<1x256xi32>
    %92 = arith.cmpi sge, %90, %91 : vector<1x256xi32>
    %c-1_i32_48 = arith.constant -1 : i32
    %93 = vector.broadcast %c-1_i32_48 : i32 to vector<1x256xi32>
    %94 = arith.addi %20, %93 : vector<1x256xi32>
    %c16_i32_49 = arith.constant 16 : i32
    %95 = vector.broadcast %c16_i32_49 : i32 to vector<1x256xi32>
    %96 = arith.cmpi slt, %94, %95 : vector<1x256xi32>
    %97 = arith.andi %92, %96 : vector<1x256xi1>
    %cst_50 = arith.constant 0.000000e+00 : f32
    %98 = vector.shape_cast %97 : vector<1x256xi1> to vector<1x256xi1>
    %99 = vector.broadcast %98 : vector<1x256xi1> to vector<4x256xi1>
    %100 = vector.broadcast %cst_50 : f32 to vector<4x256xf32>
    %101 = arith.select %99, %88, %100 : vector<4x256xi1>, vector<4x256xf32>
    %c24 = arith.constant 24 : index
    %c0_51 = arith.constant 0 : index
    %102 = vector.load %arg8[%c24, %c0_51] : memref<36x256xf32, #tpu.memory_space<vmem>>, vector<4x256xf32>
    tpu.vector_store %arg8[%c24, %c0_51], %101 {strides = array<i32>} : memref<36x256xf32, #tpu.memory_space<vmem>>, vector<4x256xf32>,
    %c0_52 = arith.constant 0 : index
    %c33 = arith.constant 33 : index
    %103 = vector.load %arg7[%c0_52, %c33] : memref<4x290xf32, #tpu.memory_space<vmem>>, vector<4x256xf32>
    %c28 = arith.constant 28 : index
    %c0_53 = arith.constant 0 : index
    %104 = vector.load %arg8[%c28, %c0_53] : memref<36x256xf32, #tpu.memory_space<vmem>>, vector<4x256xf32>
    tpu.vector_store %arg8[%c28, %c0_53], %103 {strides = array<i32>} : memref<36x256xf32, #tpu.memory_space<vmem>>, vector<4x256xf32>,
    %c0_54 = arith.constant 0 : index
    %c34 = arith.constant 34 : index
    %105 = vector.load %arg7[%c0_54, %c34] : memref<4x290xf32, #tpu.memory_space<vmem>>, vector<4x256xf32>
    %c1_i32_55 = arith.constant 1 : i32
    %106 = vector.broadcast %c1_i32_55 : i32 to vector<1x256xi32>
    %107 = arith.addi %20, %106 : vector<1x256xi32>
    %c0_i32_56 = arith.constant 0 : i32
    %108 = vector.broadcast %c0_i32_56 : i32 to vector<1x256xi32>
    %109 = arith.cmpi sge, %107, %108 : vector<1x256xi32>
    %c1_i32_57 = arith.constant 1 : i32
    %110 = vector.broadcast %c1_i32_57 : i32 to vector<1x256xi32>
    %111 = arith.addi %20, %110 : vector<1x256xi32>
    %c16_i32_58 = arith.constant 16 : i32
    %112 = vector.broadcast %c16_i32_58 : i32 to vector<1x256xi32>
    %113 = arith.cmpi slt, %111, %112 : vector<1x256xi32>
    %114 = arith.andi %109, %113 : vector<1x256xi1>
    %cst_59 = arith.constant 0.000000e+00 : f32
    %115 = vector.shape_cast %114 : vector<1x256xi1> to vector<1x256xi1>
    %116 = vector.broadcast %115 : vector<1x256xi1> to vector<4x256xi1>
    %117 = vector.broadcast %cst_59 : f32 to vector<4x256xf32>
    %118 = arith.select %116, %105, %117 : vector<4x256xi1>, vector<4x256xf32>
    %c32_60 = arith.constant 32 : index
    %c0_61 = arith.constant 0 : index
    %119 = vector.load %arg8[%c32_60, %c0_61] : memref<36x256xf32, #tpu.memory_space<vmem>>, vector<4x256xf32>
    tpu.vector_store %arg8[%c32_60, %c0_61], %118 {strides = array<i32>} : memref<36x256xf32, #tpu.memory_space<vmem>>, vector<4x256xf32>,
    %c0_62 = arith.constant 0 : index
    %c0_63 = arith.constant 0 : index
    %120 = vector.load %arg2[%c0_62, %c0_63] : memref<4x36xbf16, #tpu.memory_space<vmem>>, vector<4x36xbf16>
    %c0_64 = arith.constant 0 : index
    %c0_65 = arith.constant 0 : index
    %121 = vector.load %arg8[%c0_64, %c0_65] : memref<36x256xf32, #tpu.memory_space<vmem>>, vector<36x256xf32>
    %122 = arith.truncf %121 : vector<36x256xf32> to vector<36x256xbf16>
    %cst_66 = arith.constant dense<0.000000e+00> : vector<4x256xf32>
    %123 = tpu.matmul %120, %122, %cst_66 {dimension_numbers = #tpu.dot_dimension_numbers<[1], [0], [0], [1], [0, 0, 1, 1], [], []>} : vector<4x36xbf16>, vector<36x256xbf16>, vector<4x256xf32> -> vector<4x256xf32>
    %c0_67 = arith.constant 0 : index
    %c0_68 = arith.constant 0 : index
    %124 = vector.load %arg3[%c0_67, %c0_68] : memref<4x1xf32, #tpu.memory_space<vmem>>, vector<4x1xf32>
    %125 = vector.broadcast %124 : vector<4x1xf32> to vector<4x256xf32>
    %126 = arith.addf %123, %125 : vector<4x256xf32>
    %cst_69 = arith.constant 0.000000e+00 : f32
    %127 = vector.broadcast %cst_69 : f32 to vector<4x256xf32>
    %128 = arith.maximumf %126, %127 : vector<4x256xf32>
    %c0_70 = arith.constant 0 : index
    %c17_71 = arith.constant 17 : index
    %129 = vector.load %arg7[%c0_70, %c17_71] : memref<4x290xf32, #tpu.memory_space<vmem>>, vector<4x256xf32>
    tpu.vector_store %arg7[%c0_70, %c17_71], %128 {strides = array<i32>} : memref<4x290xf32, #tpu.memory_space<vmem>>, vector<4x256xf32>,
    %c0_72 = arith.constant 0 : index
    %c0_73 = arith.constant 0 : index
    %130 = vector.load %arg7[%c0_72, %c0_73] : memref<4x290xf32, #tpu.memory_space<vmem>>, vector<4x256xf32>
    %c-1_i32_74 = arith.constant -1 : i32
    %131 = vector.broadcast %c-1_i32_74 : i32 to vector<1x256xi32>
    %132 = arith.addi %20, %131 : vector<1x256xi32>
    %c0_i32_75 = arith.constant 0 : i32
    %133 = vector.broadcast %c0_i32_75 : i32 to vector<1x256xi32>
    %134 = arith.cmpi sge, %132, %133 : vector<1x256xi32>
    %c-1_i32_76 = arith.constant -1 : i32
    %135 = vector.broadcast %c-1_i32_76 : i32 to vector<1x256xi32>
    %136 = arith.addi %20, %135 : vector<1x256xi32>
    %c16_i32_77 = arith.constant 16 : i32
    %137 = vector.broadcast %c16_i32_77 : i32 to vector<1x256xi32>
    %138 = arith.cmpi slt, %136, %137 : vector<1x256xi32>
    %139 = arith.andi %134, %138 : vector<1x256xi1>
    %cst_78 = arith.constant 0.000000e+00 : f32
    %140 = vector.shape_cast %139 : vector<1x256xi1> to vector<1x256xi1>
    %141 = vector.broadcast %140 : vector<1x256xi1> to vector<4x256xi1>
    %142 = vector.broadcast %cst_78 : f32 to vector<4x256xf32>
    %143 = arith.select %141, %130, %142 : vector<4x256xi1>, vector<4x256xf32>
    %c0_79 = arith.constant 0 : index
    %c0_80 = arith.constant 0 : index
    %144 = vector.load %arg8[%c0_79, %c0_80] : memref<36x256xf32, #tpu.memory_space<vmem>>, vector<4x256xf32>
    tpu.vector_store %arg8[%c0_79, %c0_80], %143 {strides = array<i32>} : memref<36x256xf32, #tpu.memory_space<vmem>>, vector<4x256xf32>,
    %c0_81 = arith.constant 0 : index
    %c1_82 = arith.constant 1 : index
    %145 = vector.load %arg7[%c0_81, %c1_82] : memref<4x290xf32, #tpu.memory_space<vmem>>, vector<4x256xf32>
    %c4_83 = arith.constant 4 : index
    %c0_84 = arith.constant 0 : index
    %146 = vector.load %arg8[%c4_83, %c0_84] : memref<36x256xf32, #tpu.memory_space<vmem>>, vector<4x256xf32>
    tpu.vector_store %arg8[%c4_83, %c0_84], %145 {strides = array<i32>} : memref<36x256xf32, #tpu.memory_space<vmem>>, vector<4x256xf32>,
    %c0_85 = arith.constant 0 : index
    %c2_86 = arith.constant 2 : index
    %147 = vector.load %arg7[%c0_85, %c2_86] : memref<4x290xf32, #tpu.memory_space<vmem>>, vector<4x256xf32>
    %c1_i32_87 = arith.constant 1 : i32
    %148 = vector.broadcast %c1_i32_87 : i32 to vector<1x256xi32>
    %149 = arith.addi %20, %148 : vector<1x256xi32>
    %c0_i32_88 = arith.constant 0 : i32
    %150 = vector.broadcast %c0_i32_88 : i32 to vector<1x256xi32>
    %151 = arith.cmpi sge, %149, %150 : vector<1x256xi32>
    %c1_i32_89 = arith.constant 1 : i32
    %152 = vector.broadcast %c1_i32_89 : i32 to vector<1x256xi32>
    %153 = arith.addi %20, %152 : vector<1x256xi32>
    %c16_i32_90 = arith.constant 16 : i32
    %154 = vector.broadcast %c16_i32_90 : i32 to vector<1x256xi32>
    %155 = arith.cmpi slt, %153, %154 : vector<1x256xi32>
    %156 = arith.andi %151, %155 : vector<1x256xi1>
    %cst_91 = arith.constant 0.000000e+00 : f32
    %157 = vector.shape_cast %156 : vector<1x256xi1> to vector<1x256xi1>
    %158 = vector.broadcast %157 : vector<1x256xi1> to vector<4x256xi1>
    %159 = vector.broadcast %cst_91 : f32 to vector<4x256xf32>
    %160 = arith.select %158, %147, %159 : vector<4x256xi1>, vector<4x256xf32>
    %c8_92 = arith.constant 8 : index
    %c0_93 = arith.constant 0 : index
    %161 = vector.load %arg8[%c8_92, %c0_93] : memref<36x256xf32, #tpu.memory_space<vmem>>, vector<4x256xf32>
    tpu.vector_store %arg8[%c8_92, %c0_93], %160 {strides = array<i32>} : memref<36x256xf32, #tpu.memory_space<vmem>>, vector<4x256xf32>,
    %c0_94 = arith.constant 0 : index
    %c16_95 = arith.constant 16 : index
    %162 = vector.load %arg7[%c0_94, %c16_95] : memref<4x290xf32, #tpu.memory_space<vmem>>, vector<4x256xf32>
    %c-1_i32_96 = arith.constant -1 : i32
    %163 = vector.broadcast %c-1_i32_96 : i32 to vector<1x256xi32>
    %164 = arith.addi %20, %163 : vector<1x256xi32>
    %c0_i32_97 = arith.constant 0 : i32
    %165 = vector.broadcast %c0_i32_97 : i32 to vector<1x256xi32>
    %166 = arith.cmpi sge, %164, %165 : vector<1x256xi32>
    %c-1_i32_98 = arith.constant -1 : i32
    %167 = vector.broadcast %c-1_i32_98 : i32 to vector<1x256xi32>
    %168 = arith.addi %20, %167 : vector<1x256xi32>
    %c16_i32_99 = arith.constant 16 : i32
    %169 = vector.broadcast %c16_i32_99 : i32 to vector<1x256xi32>
    %170 = arith.cmpi slt, %168, %169 : vector<1x256xi32>
    %171 = arith.andi %166, %170 : vector<1x256xi1>
    %cst_100 = arith.constant 0.000000e+00 : f32
    %172 = vector.shape_cast %171 : vector<1x256xi1> to vector<1x256xi1>
    %173 = vector.broadcast %172 : vector<1x256xi1> to vector<4x256xi1>
    %174 = vector.broadcast %cst_100 : f32 to vector<4x256xf32>
    %175 = arith.select %173, %162, %174 : vector<4x256xi1>, vector<4x256xf32>
    %c12_101 = arith.constant 12 : index
    %c0_102 = arith.constant 0 : index
    %176 = vector.load %arg8[%c12_101, %c0_102] : memref<36x256xf32, #tpu.memory_space<vmem>>, vector<4x256xf32>
    tpu.vector_store %arg8[%c12_101, %c0_102], %175 {strides = array<i32>} : memref<36x256xf32, #tpu.memory_space<vmem>>, vector<4x256xf32>,
    %c0_103 = arith.constant 0 : index
    %c17_104 = arith.constant 17 : index
    %177 = vector.load %arg7[%c0_103, %c17_104] : memref<4x290xf32, #tpu.memory_space<vmem>>, vector<4x256xf32>
    %c16_105 = arith.constant 16 : index
    %c0_106 = arith.constant 0 : index
    %178 = vector.load %arg8[%c16_105, %c0_106] : memref<36x256xf32, #tpu.memory_space<vmem>>, vector<4x256xf32>
    tpu.vector_store %arg8[%c16_105, %c0_106], %177 {strides = array<i32>} : memref<36x256xf32, #tpu.memory_space<vmem>>, vector<4x256xf32>,
    %c0_107 = arith.constant 0 : index
    %c18_108 = arith.constant 18 : index
    %179 = vector.load %arg7[%c0_107, %c18_108] : memref<4x290xf32, #tpu.memory_space<vmem>>, vector<4x256xf32>
    %c1_i32_109 = arith.constant 1 : i32
    %180 = vector.broadcast %c1_i32_109 : i32 to vector<1x256xi32>
    %181 = arith.addi %20, %180 : vector<1x256xi32>
    %c0_i32_110 = arith.constant 0 : i32
    %182 = vector.broadcast %c0_i32_110 : i32 to vector<1x256xi32>
    %183 = arith.cmpi sge, %181, %182 : vector<1x256xi32>
    %c1_i32_111 = arith.constant 1 : i32
    %184 = vector.broadcast %c1_i32_111 : i32 to vector<1x256xi32>
    %185 = arith.addi %20, %184 : vector<1x256xi32>
    %c16_i32_112 = arith.constant 16 : i32
    %186 = vector.broadcast %c16_i32_112 : i32 to vector<1x256xi32>
    %187 = arith.cmpi slt, %185, %186 : vector<1x256xi32>
    %188 = arith.andi %183, %187 : vector<1x256xi1>
    %cst_113 = arith.constant 0.000000e+00 : f32
    %189 = vector.shape_cast %188 : vector<1x256xi1> to vector<1x256xi1>
    %190 = vector.broadcast %189 : vector<1x256xi1> to vector<4x256xi1>
    %191 = vector.broadcast %cst_113 : f32 to vector<4x256xf32>
    %192 = arith.select %190, %179, %191 : vector<4x256xi1>, vector<4x256xf32>
    %c20_114 = arith.constant 20 : index
    %c0_115 = arith.constant 0 : index
    %193 = vector.load %arg8[%c20_114, %c0_115] : memref<36x256xf32, #tpu.memory_space<vmem>>, vector<4x256xf32>
    tpu.vector_store %arg8[%c20_114, %c0_115], %192 {strides = array<i32>} : memref<36x256xf32, #tpu.memory_space<vmem>>, vector<4x256xf32>,
    %c0_116 = arith.constant 0 : index
    %c32_117 = arith.constant 32 : index
    %194 = vector.load %arg7[%c0_116, %c32_117] : memref<4x290xf32, #tpu.memory_space<vmem>>, vector<4x256xf32>
    %c-1_i32_118 = arith.constant -1 : i32
    %195 = vector.broadcast %c-1_i32_118 : i32 to vector<1x256xi32>
    %196 = arith.addi %20, %195 : vector<1x256xi32>
    %c0_i32_119 = arith.constant 0 : i32
    %197 = vector.broadcast %c0_i32_119 : i32 to vector<1x256xi32>
    %198 = arith.cmpi sge, %196, %197 : vector<1x256xi32>
    %c-1_i32_120 = arith.constant -1 : i32
    %199 = vector.broadcast %c-1_i32_120 : i32 to vector<1x256xi32>
    %200 = arith.addi %20, %199 : vector<1x256xi32>
    %c16_i32_121 = arith.constant 16 : i32
    %201 = vector.broadcast %c16_i32_121 : i32 to vector<1x256xi32>
    %202 = arith.cmpi slt, %200, %201 : vector<1x256xi32>
    %203 = arith.andi %198, %202 : vector<1x256xi1>
    %cst_122 = arith.constant 0.000000e+00 : f32
    %204 = vector.shape_cast %203 : vector<1x256xi1> to vector<1x256xi1>
    %205 = vector.broadcast %204 : vector<1x256xi1> to vector<4x256xi1>
    %206 = vector.broadcast %cst_122 : f32 to vector<4x256xf32>
    %207 = arith.select %205, %194, %206 : vector<4x256xi1>, vector<4x256xf32>
    %c24_123 = arith.constant 24 : index
    %c0_124 = arith.constant 0 : index
    %208 = vector.load %arg8[%c24_123, %c0_124] : memref<36x256xf32, #tpu.memory_space<vmem>>, vector<4x256xf32>
    tpu.vector_store %arg8[%c24_123, %c0_124], %207 {strides = array<i32>} : memref<36x256xf32, #tpu.memory_space<vmem>>, vector<4x256xf32>,
    %c0_125 = arith.constant 0 : index
    %c33_126 = arith.constant 33 : index
    %209 = vector.load %arg7[%c0_125, %c33_126] : memref<4x290xf32, #tpu.memory_space<vmem>>, vector<4x256xf32>
    %c28_127 = arith.constant 28 : index
    %c0_128 = arith.constant 0 : index
    %210 = vector.load %arg8[%c28_127, %c0_128] : memref<36x256xf32, #tpu.memory_space<vmem>>, vector<4x256xf32>
    tpu.vector_store %arg8[%c28_127, %c0_128], %209 {strides = array<i32>} : memref<36x256xf32, #tpu.memory_space<vmem>>, vector<4x256xf32>,
    %c0_129 = arith.constant 0 : index
    %c34_130 = arith.constant 34 : index
    %211 = vector.load %arg7[%c0_129, %c34_130] : memref<4x290xf32, #tpu.memory_space<vmem>>, vector<4x256xf32>
    %c1_i32_131 = arith.constant 1 : i32
    %212 = vector.broadcast %c1_i32_131 : i32 to vector<1x256xi32>
    %213 = arith.addi %20, %212 : vector<1x256xi32>
    %c0_i32_132 = arith.constant 0 : i32
    %214 = vector.broadcast %c0_i32_132 : i32 to vector<1x256xi32>
    %215 = arith.cmpi sge, %213, %214 : vector<1x256xi32>
    %c1_i32_133 = arith.constant 1 : i32
    %216 = vector.broadcast %c1_i32_133 : i32 to vector<1x256xi32>
    %217 = arith.addi %20, %216 : vector<1x256xi32>
    %c16_i32_134 = arith.constant 16 : i32
    %218 = vector.broadcast %c16_i32_134 : i32 to vector<1x256xi32>
    %219 = arith.cmpi slt, %217, %218 : vector<1x256xi32>
    %220 = arith.andi %215, %219 : vector<1x256xi1>
    %cst_135 = arith.constant 0.000000e+00 : f32
    %221 = vector.shape_cast %220 : vector<1x256xi1> to vector<1x256xi1>
    %222 = vector.broadcast %221 : vector<1x256xi1> to vector<4x256xi1>
    %223 = vector.broadcast %cst_135 : f32 to vector<4x256xf32>
    %224 = arith.select %222, %211, %223 : vector<4x256xi1>, vector<4x256xf32>
    %c32_136 = arith.constant 32 : index
    %c0_137 = arith.constant 0 : index
    %225 = vector.load %arg8[%c32_136, %c0_137] : memref<36x256xf32, #tpu.memory_space<vmem>>, vector<4x256xf32>
    tpu.vector_store %arg8[%c32_136, %c0_137], %224 {strides = array<i32>} : memref<36x256xf32, #tpu.memory_space<vmem>>, vector<4x256xf32>,
    %c0_138 = arith.constant 0 : index
    %c0_139 = arith.constant 0 : index
    %226 = vector.load %arg4[%c0_138, %c0_139] : memref<4x36xbf16, #tpu.memory_space<vmem>>, vector<4x36xbf16>
    %c0_140 = arith.constant 0 : index
    %c0_141 = arith.constant 0 : index
    %227 = vector.load %arg8[%c0_140, %c0_141] : memref<36x256xf32, #tpu.memory_space<vmem>>, vector<36x256xf32>
    %228 = arith.truncf %227 : vector<36x256xf32> to vector<36x256xbf16>
    %cst_142 = arith.constant dense<0.000000e+00> : vector<4x256xf32>
    %229 = tpu.matmul %226, %228, %cst_142 {dimension_numbers = #tpu.dot_dimension_numbers<[1], [0], [0], [1], [0, 0, 1, 1], [], []>} : vector<4x36xbf16>, vector<36x256xbf16>, vector<4x256xf32> -> vector<4x256xf32>
    %c0_143 = arith.constant 0 : index
    %c0_144 = arith.constant 0 : index
    %230 = vector.load %arg5[%c0_143, %c0_144] : memref<4x1xf32, #tpu.memory_space<vmem>>, vector<4x1xf32>
    %231 = vector.broadcast %230 : vector<4x1xf32> to vector<4x256xf32>
    %232 = arith.addf %229, %231 : vector<4x256xf32>
    %233 = arith.addf %232, %22 : vector<4x256xf32>
    %cst_145 = arith.constant 0.000000e+00 : f32
    %234 = vector.broadcast %cst_145 : f32 to vector<4x256xf32>
    %235 = arith.maximumf %233, %234 : vector<4x256xf32>
    %c0_146 = arith.constant 0 : index
    %c0_147 = arith.constant 0 : index
    %c0_148 = arith.constant 0 : index
    %236 = vector.load %arg6[%c0_146, %c0_147, %c0_148] : memref<1x4x256xf32, #tpu.memory_space<vmem>>, vector<1x4x256xf32>
    %237 = vector.shape_cast %236 : vector<1x4x256xf32> to vector<4x256xf32>
    %238 = vector.shape_cast %235 : vector<4x256xf32> to vector<1x4x256xf32>
    tpu.vector_store %arg6[%c0_146, %c0_147, %c0_148], %238 {strides = array<i32>} : memref<1x4x256xf32, #tpu.memory_space<vmem>>, vector<1x4x256xf32>,
    return
  }
  func.func @transform_0(%arg0: i32) -> (i32, i32, i32) {
    %c0_i32 = arith.constant 0 : i32
    %c0_i32_0 = arith.constant 0 : i32
    %c0_i32_1 = arith.constant 0 : i32
    return %arg0, %c0_i32, %c0_i32_0 : i32, i32, i32
  }
  func.func @transform_1(%arg0: i32) -> (i32, i32) {
    %c0_i32 = arith.constant 0 : i32
    %c0_i32_0 = arith.constant 0 : i32
    %c0_i32_1 = arith.constant 0 : i32
    return %c0_i32, %c0_i32_0 : i32, i32
  }
  func.func @transform_2(%arg0: i32) -> (i32, i32) {
    %c0_i32 = arith.constant 0 : i32
    %c0_i32_0 = arith.constant 0 : i32
    %c0_i32_1 = arith.constant 0 : i32
    return %c0_i32, %c0_i32_0 : i32, i32
  }
  func.func @transform_3(%arg0: i32) -> (i32, i32) {
    %c0_i32 = arith.constant 0 : i32
    %c0_i32_0 = arith.constant 0 : i32
    %c0_i32_1 = arith.constant 0 : i32
    return %c0_i32, %c0_i32_0 : i32, i32
  }
  func.func @transform_4(%arg0: i32) -> (i32, i32) {
    %c0_i32 = arith.constant 0 : i32
    %c0_i32_0 = arith.constant 0 : i32
    %c0_i32_1 = arith.constant 0 : i32
    return %c0_i32, %c0_i32_0 : i32, i32
  }
  func.func @transform_5(%arg0: i32) -> (i32, i32, i32) {
    %c0_i32 = arith.constant 0 : i32
    %c0_i32_0 = arith.constant 0 : i32
    %c0_i32_1 = arith.constant 0 : i32
    return %arg0, %c0_i32, %c0_i32_0 : i32, i32, i32
  }
}

</mosaic_0001>

<llo_original>
// kernel: tpu_custom_call.1
$region0: #{tpu_custom_call.1}
  #allocation0 [shape = 'u32[]', space=smem, size = 0x4, offset = 0x4, fixed_abs, tag = 'smem constant byte address 0x4 - core index']
  #allocation1 [shape = 'u32[144,128]{1,0:T(1,128)}', space=vmem, size = 0x12000, scoped, tag = 'internal scratch']
  #allocation2 [shape = 'f32[4,290]{1,0:T(4,128)}', space=vmem, size = 0x1800, scoped, tag = 'scratch operand']
  #allocation3 [shape = 'f32[36,256]{1,0:T(8,128)}', space=vmem, size = 0xa000, scoped, tag = 'scratch operand']
  %s0 = inlined_call_operand.hbm [shape: f32[2,4,256], index: 0, kind: input, shape index: {}]
  %s1 = inlined_call_operand.vmem [shape: bf16[4,36], index: 1, kind: input, shape index: {}]
  %s2 = inlined_call_operand.vmem [shape: f32[4,1], index: 2, kind: input, shape index: {}]
  %s3 = inlined_call_operand.vmem [shape: bf16[4,36], index: 3, kind: input, shape index: {}]
  %s4 = inlined_call_operand.vmem [shape: f32[4,1], index: 4, kind: input, shape index: {}]
  %s5 = inlined_call_operand.hbm [shape: f32[2,4,256], index: 5, kind: output, shape index: {}]
  %s6 = sld [smem:[#allocation0]]
  $region57: #{tpu_custom_call.1} parent=0
    _
  %s8 = ssub.s32 1, %s6
  %s9 = scalar_select 0, %s8, %s6
  $region1: #{tpu_custom_call.1} parent=0
    #allocation4 [shape = 'u8[8192]{0}', space=vmem, size = 0x2000, scoped, tag = 'input window, operand 0']
    #allocation5 [shape = 's32[2]{0}', space=sflag, size = 0x8, scoped, tag = 'scoped memory for tpu_custom_call.1']
    #allocation6 [shape = 's32[2]{0}', space=sflag, size = 0x8, scoped, tag = 'scoped memory for tpu_custom_call.1']
    #allocation7 [shape = 'u8[8192]{0}', space=vmem, size = 0x2000, scoped, tag = 'output window, operand 0']
    %10 = vsyncpa [#allocation5], 0
    %s11 = scalar_lea.sflag [#allocation5], 1
    %12 = vsyncpa %s11, 0
    %13 = vsyncpa [#allocation6], 0
    %s14 = scalar_lea.sflag [#allocation6], 1
    %15 = vsyncpa %s14, 0
    loop: start=0, step=1, limit=4
    $region2: #{tpu_custom_call.1} parent=1 // loop_pre_header
      _
    $region3: #{tpu_custom_call.1} parent=1 // loop_header
      %s17 = sphi 0, %s21
      %p18 = scmp.ge.s32.totalorder %s17, 4
      %s27 = sphi 0, %s29
      %s30 = sphi 0, %s27
      %s31 = sphi 0, %s30
      %s47 = sphi 0, %s31
      %s51 = sphi 0, %s51
      %s53 = sphi 0, %s51
      %s54 = sphi 0, %s53
      %s68 = sphi 0, %s54
      %s72 = sphi 0, %s72
      %s74 = sphi 0, %s72
      %s75 = sphi 0, %s74
      %s89 = sphi 0, %s75
      %s93 = sphi 0, %s93
      %s95 = sphi 0, %s93
      %s96 = sphi 0, %s95
      %s110 = sphi 0, %s96
      %s114 = sphi 0, %s114
      %s116 = sphi 0, %s114
      %s117 = sphi 0, %s116
      %s131 = sphi 0, %s117
      %s137 = sphi 0, %s139
      %s140 = sphi 0, %s137
      %s141 = sphi 0, %s140
      %s157 = sphi 0, %s141
    $region4: #{tpu_custom_call.1} parent=1 // loop_header_branch
      %20 = sbr.rel (%p18) target = $region8
    $region5: #{tpu_custom_call.1} parent=1 // loop_body
      %s22 = ssub.s32 %s17, 1
      %s23 = ssub.s32 %s17, 2
      %s24 = sadd.s32 %s17, 1
      %s25 = ssub.s32 %s17, %s24
      %p26 = scmp.eq.s32.totalorder %s25, 0
      %s28 = sadd.s32 %s27, 1
      %s29 = scalar_select %p26, %s27, %s28
      %p32 = pneg %p26
      %p33 = scmp.eq.s32.totalorder %s17, 1
      %p34 = por %p32, %p33
      %p35 = scmp.ne.s32.totalorder %s27, %s30
      %p36 = scmp.eq.s32.totalorder %s17, 0
      %p37 = por %p35, %p36
      %p38 = scmp.ne.s32.totalorder %s27, %s30
      %p39 = scmp.eq.s32.totalorder %s22, 1
      %p40 = por %p38, %p39
      %p41 = scmp.ne.s32.totalorder %s30, %s31
      %p42 = scmp.eq.s32.totalorder %s22, 0
      %p43 = por %p41, %p42
      %p44 = scmp.ne.s32.totalorder %s30, %s31
      %p45 = scmp.eq.s32.totalorder %s23, 1
      %p46 = por %p44, %p45
      %p48 = scmp.ne.s32.totalorder %s31, %s47
      %p49 = scmp.eq.s32.totalorder %s23, 0
      %p50 = por %p48, %p49
      %s52 = sadd.s32 %s51, 1
      %p55 = scmp.eq.s32.totalorder %s17, 1
      %p56 = scmp.ne.s32.totalorder %s51, %s53
      %p57 = scmp.eq.s32.totalorder %s17, 0
      %p58 = por %p56, %p57
      %p59 = scmp.ne.s32.totalorder %s51, %s53
      %p60 = scmp.eq.s32.totalorder %s22, 1
      %p61 = por %p59, %p60
      %p62 = scmp.ne.s32.totalorder %s53, %s54
      %p63 = scmp.eq.s32.totalorder %s22, 0
      %p64 = por %p62, %p63
      %p65 = scmp.ne.s32.totalorder %s53, %s54
      %p66 = scmp.eq.s32.totalorder %s23, 1
      %p67 = por %p65, %p66
      %p69 = scmp.ne.s32.totalorder %s54, %s68
      %p70 = scmp.eq.s32.totalorder %s23, 0
      %p71 = por %p69, %p70
      %s73 = sadd.s32 %s72, 1
      %p76 = scmp.eq.s32.totalorder %s17, 1
      %p77 = scmp.ne.s32.totalorder %s72, %s74
      %p78 = scmp.eq.s32.totalorder %s17, 0
      %p79 = por %p77, %p78
      %p80 = scmp.ne.s32.totalorder %s72, %s74
      %p81 = scmp.eq.s32.totalorder %s22, 1
      %p82 = por %p80, %p81
      %p83 = scmp.ne.s32.totalorder %s74, %s75
      %p84 = scmp.eq.s32.totalorder %s22, 0
      %p85 = por %p83, %p84
      %p86 = scmp.ne.s32.totalorder %s74, %s75
      %p87 = scmp.eq.s32.totalorder %s23, 1
      %p88 = por %p86, %p87
      %p90 = scmp.ne.s32.totalorder %s75, %s89
      %p91 = scmp.eq.s32.totalorder %s23, 0
      %p92 = por %p90, %p91
      %s94 = sadd.s32 %s93, 1
      %p97 = scmp.eq.s32.totalorder %s17, 1
      %p98 = scmp.ne.s32.totalorder %s93, %s95
      %p99 = scmp.eq.s32.totalorder %s17, 0
      %p100 = por %p98, %p99
      %p101 = scmp.ne.s32.totalorder %s93, %s95
      %p102 = scmp.eq.s32.totalorder %s22, 1
      %p103 = por %p101, %p102
      %p104 = scmp.ne.s32.totalorder %s95, %s96
      %p105 = scmp.eq.s32.totalorder %s22, 0
      %p106 = por %p104, %p105
      %p107 = scmp.ne.s32.totalorder %s95, %s96
      %p108 = scmp.eq.s32.totalorder %s23, 1
      %p109 = por %p107, %p108
      %p111 = scmp.ne.s32.totalorder %s96, %s110
      %p112 = scmp.eq.s32.totalorder %s23, 0
      %p113 = por %p111, %p112
      %s115 = sadd.s32 %s114, 1
      %p118 = scmp.eq.s32.totalorder %s17, 1
      %p119 = scmp.ne.s32.totalorder %s114, %s116
      %p120 = scmp.eq.s32.totalorder %s17, 0
      %p121 = por %p119, %p120
      %p122 = scmp.ne.s32.totalorder %s114, %s116
      %p123 = scmp.eq.s32.totalorder %s22, 1
      %p124 = por %p122, %p123
      %p125 = scmp.ne.s32.totalorder %s116, %s117
      %p126 = scmp.eq.s32.totalorder %s22, 0
      %p127 = por %p125, %p126
      %p128 = scmp.ne.s32.totalorder %s116, %s117
      %p129 = scmp.eq.s32.totalorder %s23, 1
      %p130 = por %p128, %p129
      %p132 = scmp.ne.s32.totalorder %s117, %s131
      %p133 = scmp.eq.s32.totalorder %s23, 0
      %p134 = por %p132, %p133
      %s135 = ssub.s32 %s17, %s24
      %p136 = scmp.eq.s32.totalorder %s135, 0
      %s138 = sadd.s32 %s137, 1
      %s139 = scalar_select %p136, %s137, %s138
      %p142 = pneg %p136
      %p143 = scmp.eq.s32.totalorder %s17, 1
      %p144 = por %p142, %p143
      %p145 = scmp.ne.s32.totalorder %s137, %s140
      %p146 = scmp.eq.s32.totalorder %s17, 0
      %p147 = por %p145, %p146
      %p148 = scmp.ne.s32.totalorder %s137, %s140
      %p149 = scmp.eq.s32.totalorder %s22, 1
      %p150 = por %p148, %p149
      %p151 = scmp.ne.s32.totalorder %s140, %s141
      %p152 = scmp.eq.s32.totalorder %s22, 0
      %p153 = por %p151, %p152
      %p154 = scmp.ne.s32.totalorder %s140, %s141
      %p155 = scmp.eq.s32.totalorder %s23, 1
      %p156 = por %p154, %p155
      %p158 = scmp.ne.s32.totalorder %s141, %s157
      %p159 = scmp.eq.s32.totalorder %s23, 0
      %p160 = por %p158, %p159
      %p161 = scmp.le.s32.totalorder 1, %s17
      %p162 = scmp.lt.s32.totalorder %s17, 3
      %p163 = pnand %p161, %p162
      %p164 = pneg %p163
      // Predicated region
      $region9: #{tpu_custom_call.1} parent=5 // pred_check
        _
      $region10: #{tpu_custom_call.1} parent=5 // pred_check_branch
        %166 = sbr.rel (%p163) target = $region12
      $region11: #{tpu_custom_call.1} parent=5 // pred_region
        %s167 = ssub.s32 %s17, 1
        // Predicated region
        $region13: #{tpu_custom_call.1} parent=11 // pred_check
          %p168 = pneg %p64
        $region14: #{tpu_custom_call.1} parent=11 // pred_check_branch
          %170 = sbr.rel (%p168) target = $region16
        $region15: #{tpu_custom_call.1} parent=11 // pred_region
          _
        $region16: #{tpu_custom_call.1} parent=11 // pred_fallthru
          _
        // Predicated region
        $region17: #{tpu_custom_call.1} parent=11 // pred_check
          %p171 = pneg %p85
        $region18: #{tpu_custom_call.1} parent=11 // pred_check_branch
          %173 = sbr.rel (%p171) target = $region20
        $region19: #{tpu_custom_call.1} parent=11 // pred_region
          _
        $region20: #{tpu_custom_call.1} parent=11 // pred_fallthru
          _
        // Predicated region
        $region21: #{tpu_custom_call.1} parent=11 // pred_check
          %p174 = pneg %p106
        $region22: #{tpu_custom_call.1} parent=11 // pred_check_branch
          %176 = sbr.rel (%p174) target = $region24
        $region23: #{tpu_custom_call.1} parent=11 // pred_region
          _
        $region24: #{tpu_custom_call.1} parent=11 // pred_fallthru
          _
        // Predicated region
        $region25: #{tpu_custom_call.1} parent=11 // pred_check
          %p177 = pneg %p127
        $region26: #{tpu_custom_call.1} parent=11 // pred_check_branch
          %179 = sbr.rel (%p177) target = $region28
        $region27: #{tpu_custom_call.1} parent=11 // pred_region
          _
        $region28: #{tpu_custom_call.1} parent=11 // pred_fallthru
          _
      $region12: #{tpu_custom_call.1} parent=5 // pred_fallthru
        _
      %p180 = scmp.lt.s32.totalorder %s17, 2
      // Predicated region
      $region29: #{tpu_custom_call.1} parent=5 // pred_check
        %p181 = pneg %p180
      $region30: #{tpu_custom_call.1} parent=5 // pred_check_branch
        %183 = sbr.rel (%p181) target = $region32
      $region31: #{tpu_custom_call.1} parent=5 // pred_region
        // Predicated region
        $region33: #{tpu_custom_call.1} parent=31 // pred_check
          %p184 = pneg %p37
        $region34: #{tpu_custom_call.1} parent=31 // pred_check_branch
          %186 = sbr.rel (%p184) target = $region36
        $region35: #{tpu_custom_call.1} parent=31 // pred_region
          %s187 = sand.u32 %s27, 1
          %s188 = scalar_lea.sflag [#allocation5], %s187
          %s189 = sand.u32 %s27, 1
          %s190 = smul.addr %s189, 8
          %s191 = scalar_lea.vmem [#allocation4], %s190
          %s193 = ssub.s32 128, 128
          %194 = vsyncadd %s188, %s193
          %s195 = smul.addr %s17, 2
          %s196 = smul.addr %s195, 64
          %s197 = scalar_lea.hbm %s0, %s196
          %s199 = sshll.u32 %s191, 4
          %s200 = int_to_ptr.vmem [resolvable:$true] %s199
          %202 = dma.hbm_to_vmem [thread:$0]  %s197, 128, %s200, %s188
        $region36: #{tpu_custom_call.1} parent=31 // pred_fallthru
          _
      $region32: #{tpu_custom_call.1} parent=5 // pred_fallthru
        _
      %p203 = scmp.le.s32.totalorder 1, %s17
      %p204 = scmp.lt.s32.totalorder %s17, 3
      %p205 = pnand %p203, %p204
      %p206 = pneg %p205
      // Predicated region
      $region37: #{tpu_custom_call.1} parent=5 // pred_check
        _
      $region38: #{tpu_custom_call.1} parent=5 // pred_check_branch
        %208 = sbr.rel (%p205) target = $region40
      $region39: #{tpu_custom_call.1} parent=5 // pred_region
        %s209 = ssub.s32 %s17, 1
        %s210 = sand.u32 %s30, 1
        %s211 = scalar_lea.sflag [#allocation5], %s210
        %s212 = sand.u32 %s30, 1
        %s213 = smul.addr %s212, 8
        %s214 = scalar_lea.vmem [#allocation4], %s213
        // Predicated region
        $region41: #{tpu_custom_call.1} parent=39 // pred_check
          %p215 = pneg %p43
        $region42: #{tpu_custom_call.1} parent=39 // pred_check_branch
          %217 = sbr.rel (%p215) target = $region44
        $region43: #{tpu_custom_call.1} parent=39 // pred_region
          %218 = dma.done %s211, 128
        $region44: #{tpu_custom_call.1} parent=39 // pred_fallthru
          _
        %s219 = sand.u32 %s30, 1
        %s220 = scalar_lea.sflag [#allocation5], %s219
        %s221 = sand.u32 %s30, 1
        %s222 = smul.addr %s221, 8
        %s223 = scalar_lea.vmem [#allocation4], %s222
        %p224 = pneg %p43
        %p225 = pneg %p40
        %p226 = pneg %p64
        %p227 = pneg %p61
        %p228 = pneg %p85
        %p229 = pneg %p82
        %p230 = pneg %p106
        %p231 = pneg %p103
        %p232 = pneg %p127
        %p233 = pneg %p124
        %p234 = pneg %p153
        %p235 = pneg %p150
        %s236 = sand.u32 %s140, 1
        %s237 = scalar_lea.sflag [#allocation6], %s236
        %s238 = sand.u32 %s140, 1
        %s239 = smul.addr %s238, 8
        %s240 = scalar_lea.vmem [#allocation7], %s239
        %vm242 = vcmask 134144
        %243 = vst.msk [vmem:[#allocation2] sm:$0xf] %vm242, 0.0
        %vm244 = vcmask 273544
        %245 = vst.msk [vmem:[#allocation2 + $0x8] sm:$0xf] %vm244, 0.0
        %v246 = vlaneseq
        %v247 = vand.u32 %v246, 127
        %v248 = vadd.s32 %v247, 128
        %vm249 = vcmp.lt.s32.totalorder %v247, 0
        %v250 = vsub.s32 0, %v247
        %v251 = vsel %vm249, %v250, %v247
        %v252 = vshrl.u32 %v251, 4
        %v253 = vand.u32 %v251, 15
        %v254 = vsub.s32 0, %v253
        %v255 = vsel %vm249, %v254, %v253
        %vm256 = vcmp.lt.s32.totalorder %v248, 0
        %v257 = vsub.s32 0, %v248
        %v258 = vsel %vm256, %v257, %v248
        %v259 = vshrl.u32 %v258, 4
        %v260 = vand.u32 %v258, 15
        %v261 = vsub.s32 0, %v260
        %v262 = vsel %vm256, %v261, %v260
        %vm263 = vcmp.ne.s32.totalorder %v255, 0
        %vm264 = vcmp.ne.s32.totalorder %v262, 0
        %vm265 = vcmp.lt.s32.totalorder %v255, 0
        %vm266 = vcmp.lt.s32.totalorder %v262, 0
        %vm267 = vmand %vm265, %vm263
        %vm268 = vmand %vm266, %vm264
        %v269 = vadd.s32 %v255, 16
        %v270 = vadd.s32 %v262, 16
        %v271 = vsel %vm267, %v269, %v255
        %v272 = vsel %vm268, %v270, %v262
        %v273 = vld [vmem:[%s214] sm:$0xff]
        %275 = vrot.lane.b32.xlu0 %v273, 17
        %v276 = vpop.permute.xlu0 %275
        %v277 = vrot.slane %v276, 4
        %vm278 = vcmask 138240
        %v279 = vsel %vm278, %v277, %v276
        %vm282 = vcmask 1043592
        %vm283 = vcmask 1047556
        %vm284 = vmor %vm283, %vm282
        %285 = vst.msk [vmem:[#allocation2] sm:$0xff] %vm284, %v279
        %286 = vst.msk [vmem:[#allocation2 + $0x8] sm:$0xf] %vm242, %v277
        %v287 = vld [vmem:[#allocation2] sm:$0xff]
        %v288 = vadd.s32 %v271, 4294967295
        %v289 = vadd.s32 %v272, 4294967295
        %vm290 = vcmp.ge.s32.totalorder %v288, 0
        %vm291 = vcmp.ge.s32.totalorder %v289, 0
        %vm292 = vcmp.lt.s32.totalorder %v288, 16
        %vm293 = vcmp.lt.s32.totalorder %v289, 16
        %vm294 = vmand %vm290, %vm292
        %vm295 = vmand %vm291, %vm293
        %v296 = vsel %vm294, 1, 0
        %v297 = vsel %vm295, 1, 0
        %vm298 = vcmp.eq.s32.totalorder %v296, 1
        %vm299 = vcmp.eq.s32.totalorder %v297, 1
        %v301 = vcombine.high %v287, %v287
        %v303 = vsel %vm298, %v287, 0.0
        %v304 = vsel %vm299, %v301, 0.0
        %305 = vst [vmem:[#allocation3] sm:$0xf] %v303
        %306 = vst [vmem:[#allocation3 + $0x8] sm:$0xf] %v304
        %v307 = vld [vmem:[#allocation2] sm:$0xff]
        %v308 = vld [vmem:[#allocation2 + $0x8] sm:$0xf]
        %v311 = vcombine.low %v307, %v307
        %v312 = vcombine.low %v308, %v308
        %313 = vrot.lane.b32.xlu0 %v311, 127
        %v314 = vpop.permute.xlu0 %313
        %315 = vrot.lane.b32.xlu0 %v307, 127
        %v316 = vpop.permute.xlu0 %315
        %317 = vrot.lane.b32.xlu0 %v312, 127
        %v318 = vpop.permute.xlu0 %317
        %vm319 = vcmask 1039360
        %v320 = vsel %vm319, %v314, %v316
        %v321 = vsel %vm319, %v316, %v318
        %324 = vst [vmem:[#allocation3] sm:$0xf0] %v320
        %325 = vst [vmem:[#allocation3 + $0x8] sm:$0xf0] %v321
        %v326 = vld [vmem:[#allocation2] sm:$0xff]
        %v327 = vld [vmem:[#allocation2 + $0x8] sm:$0xf]
        %v328 = vadd.s32 %v271, 1
        %v329 = vadd.s32 %v272, 1
        %vm330 = vcmp.ge.s32.totalorder %v328, 0
        %vm331 = vcmp.ge.s32.totalorder %v329, 0
        %vm332 = vcmp.lt.s32.totalorder %v328, 16
        %vm333 = vcmp.lt.s32.totalorder %v329, 16
        %vm334 = vmand %vm330, %vm332
        %vm335 = vmand %vm331, %vm333
        %v336 = vsel %vm334, 1, 0
        %v337 = vsel %vm335, 1, 0
        %vm338 = vcmp.eq.s32.totalorder %v336, 1
        %vm339 = vcmp.eq.s32.totalorder %v337, 1
        %v342 = vcombine.high %v326, %v326
        %343 = vrot.lane.b32.xlu0 %v326, 126
        %v344 = vpop.permute.xlu0 %343
        %345 = vrot.lane.b32.xlu0 %v342, 126
        %v346 = vpop.permute.xlu0 %345
        %347 = vrot.lane.b32.xlu0 %v327, 126
        %v348 = vpop.permute.xlu0 %347
        %vm349 = vcmask 1031168
        %v350 = vsel %vm349, %v344, %v346
        %v351 = vsel %vm349, %v346, %v348
        %v354 = vsel %vm338, %v350, 0.0
        %v355 = vsel %vm339, %v351, 0.0
        %356 = vst [vmem:[#allocation3 + $0x10] sm:$0xf] %v354
        %357 = vst [vmem:[#allocation3 + $0x18] sm:$0xf] %v355
        %v358 = vld [vmem:[#allocation2] sm:$0xff]
        %v359 = vld [vmem:[#allocation2 + $0x8] sm:$0xf]
        %v362 = vcombine.high %v358, %v358
        %363 = vrot.lane.b32.xlu0 %v358, 112
        %v364 = vpop.permute.xlu0 %363
        %365 = vrot.lane.b32.xlu0 %v362, 112
        %v366 = vpop.permute.xlu0 %365
        %367 = vrot.lane.b32.xlu0 %v359, 112
        %v368 = vpop.permute.xlu0 %367
        %vm369 = vcmask 916480
        %v370 = vsel %vm369, %v364, %v366
        %v371 = vsel %vm369, %v366, %v368
        %v374 = vsel %vm298, %v370, 0.0
        %v375 = vsel %vm299, %v371, 0.0
        %v378 = vrot.slane %v374, 4
        %v379 = vrot.slane %v375, 4
        %382 = vst [vmem:[#allocation3 + $0x10] sm:$0xf0] %v378
        %383 = vst [vmem:[#allocation3 + $0x18] sm:$0xf0] %v379
        %v384 = vld [vmem:[#allocation2] sm:$0xff]
        %v385 = vld [vmem:[#allocation2 + $0x8] sm:$0xf]
        %v388 = vcombine.high %v384, %v384
        %389 = vrot.lane.b32.xlu0 %v384, 111
        %v390 = vpop.permute.xlu0 %389
        %391 = vrot.lane.b32.xlu0 %v388, 111
        %v392 = vpop.permute.xlu0 %391
        %393 = vrot.lane.b32.xlu0 %v385, 111
        %v394 = vpop.permute.xlu0 %393
        %vm395 = vcmask 908288
        %v396 = vsel %vm395, %v390, %v392
        %v397 = vsel %vm395, %v392, %v394
        %400 = vst [vmem:[#allocation3 + $0x20] sm:$0xf] %v396
        %401 = vst [vmem:[#allocation3 + $0x28] sm:$0xf] %v397
        %v402 = vld [vmem:[#allocation2] sm:$0xff]
        %v403 = vld [vmem:[#allocation2 + $0x8] sm:$0xf]
        %v406 = vcombine.high %v402, %v402
        %407 = vrot.lane.b32.xlu0 %v402, 110
        %v408 = vpop.permute.xlu0 %407
        %409 = vrot.lane.b32.xlu0 %v406, 110
        %v410 = vpop.permute.xlu0 %409
        %411 = vrot.lane.b32.xlu0 %v403, 110
        %v412 = vpop.permute.xlu0 %411
        %vm413 = vcmask 900096
        %v414 = vsel %vm413, %v408, %v410
        %v415 = vsel %vm413, %v410, %v412
        %v418 = vsel %vm338, %v414, 0.0
        %v419 = vsel %vm339, %v415, 0.0
        %v422 = vrot.slane %v418, 4
        %v423 = vrot.slane %v419, 4
        %426 = vst [vmem:[#allocation3 + $0x20] sm:$0xf0] %v422
        %427 = vst [vmem:[#allocation3 + $0x28] sm:$0xf0] %v423
        %v428 = vld [vmem:[#allocation2] sm:$0xff]
        %v429 = vld [vmem:[#allocation2 + $0x8] sm:$0xf]
        %v432 = vcombine.high %v428, %v428
        %433 = vrot.lane.b32.xlu0 %v428, 96
        %v434 = vpop.permute.xlu0 %433
        %435 = vrot.lane.b32.xlu0 %v432, 96
        %v436 = vpop.permute.xlu0 %435
        %437 = vrot.lane.b32.xlu0 %v429, 96
        %v438 = vpop.permute.xlu0 %437
        %vm439 = vcmask 785408
        %v440 = vsel %vm439, %v434, %v436
        %v441 = vsel %vm439, %v436, %v438
        %v444 = vsel %vm298, %v440, 0.0
        %v445 = vsel %vm299, %v441, 0.0
        %446 = vst [vmem:[#allocation3 + $0x30] sm:$0xf] %v444
        %447 = vst [vmem:[#allocation3 + $0x38] sm:$0xf] %v445
        %v448 = vld [vmem:[#allocation2] sm:$0xff]
        %v449 = vld [vmem:[#allocation2 + $0x8] sm:$0xf]
        %v452 = vcombine.low %v448, %v448
        %v453 = vcombine.low %v449, %v449
        %454 = vrot.lane.b32.xlu0 %v452, 95
        %v455 = vpop.permute.xlu0 %454
        %456 = vrot.lane.b32.xlu0 %v448, 95
        %v457 = vpop.permute.xlu0 %456
        %458 = vrot.lane.b32.xlu0 %v453, 95
        %v459 = vpop.permute.xlu0 %458
        %vm460 = vcmask 777216
        %v461 = vsel %vm460, %v455, %v457
        %v462 = vsel %vm460, %v457, %v459
        %465 = vst [vmem:[#allocation3 + $0x30] sm:$0xf0] %v461
        %466 = vst [vmem:[#allocation3 + $0x38] sm:$0xf0] %v462
        %v467 = vld [vmem:[#allocation2] sm:$0xff]
        %v468 = vld [vmem:[#allocation2 + $0x8] sm:$0xf]
        %v471 = vcombine.high %v467, %v467
        %472 = vrot.lane.b32.xlu0 %v467, 94
        %v473 = vpop.permute.xlu0 %472
        %474 = vrot.lane.b32.xlu0 %v471, 94
        %v475 = vpop.permute.xlu0 %474
        %476 = vrot.lane.b32.xlu0 %v468, 94
        %v477 = vpop.permute.xlu0 %476
        %vm478 = vcmask 769024
        %v479 = vsel %vm478, %v473, %v475
        %v480 = vsel %vm478, %v475, %v477
        %v483 = vsel %vm338, %v479, 0.0
        %v484 = vsel %vm339, %v480, 0.0
        %485 = vst [vmem:[#allocation3 + $0x40] sm:$0xf] %v483
        %486 = vst [vmem:[#allocation3 + $0x48] sm:$0xf] %v484
        %v487 = vld [vmem:[%s1] sm:$0x3]
        %v488 = vld [vmem:[#allocation3] sm:$0xff]
        %v489 = vld [vmem:[#allocation3 + $0x8] sm:$0xff]
        %v490 = vld [vmem:[#allocation3 + $0x10] sm:$0xff]
        %v491 = vld [vmem:[#allocation3 + $0x18] sm:$0xff]
        %v492 = vld [vmem:[#allocation3 + $0x20] sm:$0xff]
        %v493 = vld [vmem:[#allocation3 + $0x28] sm:$0xff]
        %v494 = vld [vmem:[#allocation3 + $0x30] sm:$0xff]
        %v495 = vld [vmem:[#allocation3 + $0x38] sm:$0xff]
        %v496 = vld [vmem:[#allocation3 + $0x40] sm:$0xf]
        %v497 = vld [vmem:[#allocation3 + $0x48] sm:$0xf]
        %v498 = vpack.c.bf16 %v490, %v488
        %v499 = vpack.c.bf16 %v491, %v489
        %v500 = vpack.c.bf16 %v494, %v492
        %v501 = vpack.c.bf16 %v495, %v493
        %v502 = vpack.c.bf16 %v496, %v496
        %v503 = vpack.c.bf16 %v497, %v497
        %v504 = vld [vmem:[%s2] sm:$0xf]
        %506 = vset.pattern.permute.xlu0 0
        %507 = vperm.xlu0 %506, %v504
        %v508 = vpop.permute.xlu0 %507
        %vm510 = vcmask 293888
        %v512 = vsel %vm510, %v487, 0
        %vm514 = vcmask 1041408
        %v516 = vsel %vm514, %v502, 0
        %v519 = vsel %vm514, %v503, 0
        %521 = vmatprep.subr.bf16.mxu0 0
        %522 = vmatpush1.bf16.msra.mxu0 0
        %523 = vmatprep.subr.bf16.mxu0 0
        %524 = vmatpush1.bf16.msra.mxu0 0
        %525 = vmatprep.subr.bf16.mxu0 0
        %526 = vmatpush1.bf16.msra.mxu0 0
        %527 = vmatprep.subr.bf16.mxu0 0
        %528 = vmatpush1.bf16.msra.mxu0 0
        %529 = vmatprep.subr.bf16.mxu0 0
        %530 = vmatpush1.bf16.msra.mxu0 0
        %531 = vmatprep.subr.bf16.mxu0 %v519
        %532 = vmatpush1.bf16.msra.mxu0 %v516
        %533 = vmatprep.subr.bf16.mxu0 %v501
        %534 = vmatpush1.bf16.msra.mxu0 %v500
        %535 = vmatprep.subr.bf16.mxu0 %v499
        %536 = vmatpush1.bf16.msra.mxu0 %v498
        %537 = vmatprep.subr.bf16.mxu0 0
        %538 = vmatpush2.bf16.msra.mxu0 0
        %539 = vmatprep.subr.bf16.mxu0 0
        %540 = vmatpush2.bf16.msra.mxu0 0
        %541 = vmatprep.subr.bf16.mxu0 0
        %542 = vmatpush2.bf16.msra.mxu0 0
        %543 = vmatprep.subr.bf16.mxu0 0
        %544 = vmatpush2.bf16.msra.mxu0 0
        %545 = vmatprep.subr.bf16.mxu0 0
        %546 = vmatpush2.bf16.msra.mxu0 0
        %547 = vmatprep.subr.bf16.mxu0 0
        %548 = vmatpush2.bf16.msra.mxu0 0
        %549 = vmatprep.subr.bf16.mxu0 0
        %550 = vmatpush2.bf16.msra.mxu0 0
        %551 = vmatprep.subr.bf16.mxu0 0
        %552 = vmatpush2.bf16.msra.mxu0 0
        %553 = vmatprep.mubr.bf16.mxu0 0
        %554 = vmatmul.mubr.bf16.gmra.mxu0 %v512
        %v555 = vpop.f32.mrf.mxu0
        %v556 = vadd.f32 %v508, %v555
        %v557 = vpop.f32.mrf.mxu0
        %v558 = vadd.f32 %v508, %v557
        %v559 = vpop.f32.mrf.mxu0
        %v560 = vpop.f32.mrf.mxu0
        %561 = vdwg.mxu0
        %v562 = vmax.f32 %v556, 0.0
        %v563 = vmax.f32 %v558, 0.0
        %v566 = vcombine.low %v562, %v563
        %567 = vrot.lane.b32.xlu0 %v566, 17
        %v568 = vpop.permute.xlu0 %567
        %v569 = vrot.slane %v568, 4
        %v570 = vsel %vm278, %v569, %v568
        %573 = vst.msk [vmem:[#allocation2] sm:$0xff] %vm284, %v570
        %574 = vst.msk [vmem:[#allocation2 + $0x8] sm:$0xf] %vm242, %v569
        %v575 = vld [vmem:[#allocation2] sm:$0xff]
        %v577 = vcombine.high %v575, %v575
        %v579 = vsel %vm298, %v575, 0.0
        %v580 = vsel %vm299, %v577, 0.0
        %581 = vst [vmem:[#allocation3] sm:$0xf] %v579
        %582 = vst [vmem:[#allocation3 + $0x8] sm:$0xf] %v580
        %v583 = vld [vmem:[#allocation2] sm:$0xff]
        %v584 = vld [vmem:[#allocation2 + $0x8] sm:$0xf]
        %v587 = vcombine.low %v583, %v583
        %v588 = vcombine.low %v584, %v584
        %589 = vrot.lane.b32.xlu0 %v587, 127
        %v590 = vpop.permute.xlu0 %589
        %591 = vrot.lane.b32.xlu0 %v583, 127
        %v592 = vpop.permute.xlu0 %591
        %593 = vrot.lane.b32.xlu0 %v588, 127
        %v594 = vpop.permute.xlu0 %593
        %v595 = vsel %vm319, %v590, %v592
        %v596 = vsel %vm319, %v592, %v594
        %599 = vst [vmem:[#allocation3] sm:$0xf0] %v595
        %600 = vst [vmem:[#allocation3 + $0x8] sm:$0xf0] %v596
        %v601 = vld [vmem:[#allocation2] sm:$0xff]
        %v602 = vld [vmem:[#allocation2 + $0x8] sm:$0xf]
        %v605 = vcombine.high %v601, %v601
        %606 = vrot.lane.b32.xlu0 %v601, 126
        %v607 = vpop.permute.xlu0 %606
        %608 = vrot.lane.b32.xlu0 %v605, 126
        %v609 = vpop.permute.xlu0 %608
        %610 = vrot.lane.b32.xlu0 %v602, 126
        %v611 = vpop.permute.xlu0 %610
        %v612 = vsel %vm349, %v607, %v609
        %v613 = vsel %vm349, %v609, %v611
        %v616 = vsel %vm338, %v612, 0.0
        %v617 = vsel %vm339, %v613, 0.0
        %618 = vst [vmem:[#allocation3 + $0x10] sm:$0xf] %v616
        %619 = vst [vmem:[#allocation3 + $0x18] sm:$0xf] %v617
        %v620 = vld [vmem:[#allocation2] sm:$0xff]
        %v621 = vld [vmem:[#allocation2 + $0x8] sm:$0xf]
        %v624 = vcombine.high %v620, %v620
        %625 = vrot.lane.b32.xlu0 %v620, 112
        %v626 = vpop.permute.xlu0 %625
        %627 = vrot.lane.b32.xlu0 %v624, 112
        %v628 = vpop.permute.xlu0 %627
        %629 = vrot.lane.b32.xlu0 %v621, 112
        %v630 = vpop.permute.xlu0 %629
        %v631 = vsel %vm369, %v626, %v628
        %v632 = vsel %vm369, %v628, %v630
        %v635 = vsel %vm298, %v631, 0.0
        %v636 = vsel %vm299, %v632, 0.0
        %v639 = vrot.slane %v635, 4
        %v640 = vrot.slane %v636, 4
        %643 = vst [vmem:[#allocation3 + $0x10] sm:$0xf0] %v639
        %644 = vst [vmem:[#allocation3 + $0x18] sm:$0xf0] %v640
        %v645 = vld [vmem:[#allocation2] sm:$0xff]
        %v646 = vld [vmem:[#allocation2 + $0x8] sm:$0xf]
        %v649 = vcombine.high %v645, %v645
        %650 = vrot.lane.b32.xlu0 %v645, 111
        %v651 = vpop.permute.xlu0 %650
        %652 = vrot.lane.b32.xlu0 %v649, 111
        %v653 = vpop.permute.xlu0 %652
        %654 = vrot.lane.b32.xlu0 %v646, 111
        %v655 = vpop.permute.xlu0 %654
        %v656 = vsel %vm395, %v651, %v653
        %v657 = vsel %vm395, %v653, %v655
        %660 = vst [vmem:[#allocation3 + $0x20] sm:$0xf] %v656
        %661 = vst [vmem:[#allocation3 + $0x28] sm:$0xf] %v657
        %v662 = vld [vmem:[#allocation2] sm:$0xff]
        %v663 = vld [vmem:[#allocation2 + $0x8] sm:$0xf]
        %v666 = vcombine.high %v662, %v662
        %667 = vrot.lane.b32.xlu0 %v662, 110
        %v668 = vpop.permute.xlu0 %667
        %669 = vrot.lane.b32.xlu0 %v666, 110
        %v670 = vpop.permute.xlu0 %669
        %671 = vrot.lane.b32.xlu0 %v663, 110
        %v672 = vpop.permute.xlu0 %671
        %v673 = vsel %vm413, %v668, %v670
        %v674 = vsel %vm413, %v670, %v672
        %v677 = vsel %vm338, %v673, 0.0
        %v678 = vsel %vm339, %v674, 0.0
        %v681 = vrot.slane %v677, 4
        %v682 = vrot.slane %v678, 4
        %685 = vst [vmem:[#allocation3 + $0x20] sm:$0xf0] %v681
        %686 = vst [vmem:[#allocation3 + $0x28] sm:$0xf0] %v682
        %v687 = vld [vmem:[#allocation2] sm:$0xff]
        %v688 = vld [vmem:[#allocation2 + $0x8] sm:$0xf]
        %v691 = vcombine.high %v687, %v687
        %692 = vrot.lane.b32.xlu0 %v687, 96
        %v693 = vpop.permute.xlu0 %692
        %694 = vrot.lane.b32.xlu0 %v691, 96
        %v695 = vpop.permute.xlu0 %694
        %696 = vrot.lane.b32.xlu0 %v688, 96
        %v697 = vpop.permute.xlu0 %696
        %v698 = vsel %vm439, %v693, %v695
        %v699 = vsel %vm439, %v695, %v697
        %v702 = vsel %vm298, %v698, 0.0
        %v703 = vsel %vm299, %v699, 0.0
        %704 = vst [vmem:[#allocation3 + $0x30] sm:$0xf] %v702
        %705 = vst [vmem:[#allocation3 + $0x38] sm:$0xf] %v703
        %v706 = vld [vmem:[#allocation2] sm:$0xff]
        %v707 = vld [vmem:[#allocation2 + $0x8] sm:$0xf]
        %v710 = vcombine.low %v706, %v706
        %v711 = vcombine.low %v707, %v707
        %712 = vrot.lane.b32.xlu0 %v710, 95
        %v713 = vpop.permute.xlu0 %712
        %714 = vrot.lane.b32.xlu0 %v706, 95
        %v715 = vpop.permute.xlu0 %714
        %716 = vrot.lane.b32.xlu0 %v711, 95
        %v717 = vpop.permute.xlu0 %716
        %v718 = vsel %vm460, %v713, %v715
        %v719 = vsel %vm460, %v715, %v717
        %722 = vst [vmem:[#allocation3 + $0x30] sm:$0xf0] %v718
        %723 = vst [vmem:[#allocation3 + $0x38] sm:$0xf0] %v719
        %v724 = vld [vmem:[#allocation2] sm:$0xff]
        %v725 = vld [vmem:[#allocation2 + $0x8] sm:$0xf]
        %v728 = vcombine.high %v724, %v724
        %729 = vrot.lane.b32.xlu0 %v724, 94
        %v730 = vpop.permute.xlu0 %729
        %731 = vrot.lane.b32.xlu0 %v728, 94
        %v732 = vpop.permute.xlu0 %731
        %733 = vrot.lane.b32.xlu0 %v725, 94
        %v734 = vpop.permute.xlu0 %733
        %v735 = vsel %vm478, %v730, %v732
        %v736 = vsel %vm478, %v732, %v734
        %v739 = vsel %vm338, %v735, 0.0
        %v740 = vsel %vm339, %v736, 0.0
        %741 = vst [vmem:[#allocation3 + $0x40] sm:$0xf] %v739
        %742 = vst [vmem:[#allocation3 + $0x48] sm:$0xf] %v740
        %v743 = vld [vmem:[%s3] sm:$0x3]
        %v744 = vld [vmem:[#allocation3] sm:$0xff]
        %v745 = vld [vmem:[#allocation3 + $0x8] sm:$0xff]
        %v746 = vld [vmem:[#allocation3 + $0x10] sm:$0xff]
        %v747 = vld [vmem:[#allocation3 + $0x18] sm:$0xff]
        %v748 = vld [vmem:[#allocation3 + $0x20] sm:$0xff]
        %v749 = vld [vmem:[#allocation3 + $0x28] sm:$0xff]
        %v750 = vld [vmem:[#allocation3 + $0x30] sm:$0xff]
        %v751 = vld [vmem:[#allocation3 + $0x38] sm:$0xff]
        %v752 = vld [vmem:[#allocation3 + $0x40] sm:$0xf]
        %v753 = vld [vmem:[#allocation3 + $0x48] sm:$0xf]
        %v754 = vpack.c.bf16 %v746, %v744
        %v755 = vpack.c.bf16 %v747, %v745
        %v756 = vpack.c.bf16 %v750, %v748
        %v757 = vpack.c.bf16 %v751, %v749
        %v758 = vpack.c.bf16 %v752, %v752
        %v759 = vpack.c.bf16 %v753, %v753
        %v760 = vld [vmem:[%s4] sm:$0xf]
        %762 = vset.pattern.permute.xlu0 0
        %763 = vperm.xlu0 %762, %v760
        %v764 = vpop.permute.xlu0 %763
        %v767 = vsel %vm510, %v743, 0
        %v770 = vsel %vm514, %v758, 0
        %v773 = vsel %vm514, %v759, 0
        %775 = vmatprep.subr.bf16.mxu0 0
        %776 = vmatpush1.bf16.msra.mxu0 0
        %777 = vmatprep.subr.bf16.mxu0 0
        %778 = vmatpush1.bf16.msra.mxu0 0
        %779 = vmatprep.subr.bf16.mxu0 0
        %780 = vmatpush1.bf16.msra.mxu0 0
        %781 = vmatprep.subr.bf16.mxu0 0
        %782 = vmatpush1.bf16.msra.mxu0 0
        %783 = vmatprep.subr.bf16.mxu0 0
        %784 = vmatpush1.bf16.msra.mxu0 0
        %785 = vmatprep.subr.bf16.mxu0 %v773
        %786 = vmatpush1.bf16.msra.mxu0 %v770
        %787 = vmatprep.subr.bf16.mxu0 %v757
        %788 = vmatpush1.bf16.msra.mxu0 %v756
        %789 = vmatprep.subr.bf16.mxu0 %v755
        %790 = vmatpush1.bf16.msra.mxu0 %v754
        %791 = vmatprep.subr.bf16.mxu0 0
        %792 = vmatpush2.bf16.msra.mxu0 0
        %793 = vmatprep.subr.bf16.mxu0 0
        %794 = vmatpush2.bf16.msra.mxu0 0
        %795 = vmatprep.subr.bf16.mxu0 0
        %796 = vmatpush2.bf16.msra.mxu0 0
        %797 = vmatprep.subr.bf16.mxu0 0
        %798 = vmatpush2.bf16.msra.mxu0 0
        %799 = vmatprep.subr.bf16.mxu0 0
        %800 = vmatpush2.bf16.msra.mxu0 0
        %801 = vmatprep.subr.bf16.mxu0 0
        %802 = vmatpush2.bf16.msra.mxu0 0
        %803 = vmatprep.subr.bf16.mxu0 0
        %804 = vmatpush2.bf16.msra.mxu0 0
        %805 = vmatprep.subr.bf16.mxu0 0
        %806 = vmatpush2.bf16.msra.mxu0 0
        %807 = vmatprep.mubr.bf16.mxu0 0
        %808 = vmatmul.mubr.bf16.gmra.mxu0 %v767
        %v809 = vpop.f32.mrf.mxu0
        %v810 = vadd.f32 %v764, %v809
        %v811 = vpop.f32.mrf.mxu0
        %v812 = vadd.f32 %v764, %v811
        %v813 = vpop.f32.mrf.mxu0
        %v814 = vpop.f32.mrf.mxu0
        %815 = vdwg.mxu0
        %v816 = vcombine.high %v273, %v273
        %v818 = vadd.f32 %v810, %v273
        %v819 = vadd.f32 %v812, %v816
        %v820 = vmax.f32 %v818, 0.0
        %v821 = vmax.f32 %v819, 0.0
        %v824 = vcombine.low %v820, %v821
        %826 = vst [vmem:[%s240] sm:$0xff] %v824
        %s827 = sand.u32 %s140, 1
        %s828 = scalar_lea.sflag [#allocation6], %s827
        %s829 = sand.u32 %s140, 1
        %s830 = smul.addr %s829, 8
        %s831 = scalar_lea.vmem [#allocation7], %s830
        // Predicated region
        $region45: #{tpu_custom_call.1} parent=39 // pred_check
          %p832 = pneg %p150
        $region46: #{tpu_custom_call.1} parent=39 // pred_check_branch
          %834 = sbr.rel (%p832) target = $region48
        $region47: #{tpu_custom_call.1} parent=39 // pred_region
          %s836 = ssub.s32 128, 128
          %837 = vsyncadd %s828, %s836
          %s838 = smul.addr %s22, 2
          %s839 = smul.addr %s838, 64
          %s840 = scalar_lea.hbm %s5, %s839
          %s842 = sshll.u32 %s831, 4
          %s843 = int_to_ptr.vmem [resolvable:$true] %s842
          %845 = dma.vmem_to_hbm [thread:$0]  %s843, 128, %s840, %s828
        $region48: #{tpu_custom_call.1} parent=39 // pred_fallthru
          _
      $region40: #{tpu_custom_call.1} parent=5 // pred_fallthru
        _
      %p846 = scmp.le.s32.totalorder 2, %s17
      // Predicated region
      $region49: #{tpu_custom_call.1} parent=5 // pred_check
        %p847 = pneg %p846
      $region50: #{tpu_custom_call.1} parent=5 // pred_check_branch
        %849 = sbr.rel (%p847) target = $region52
      $region51: #{tpu_custom_call.1} parent=5 // pred_region
        %s850 = ssub.s32 %s17, 2
        // Predicated region
        $region53: #{tpu_custom_call.1} parent=51 // pred_check
          %p851 = pneg %p156
        $region54: #{tpu_custom_call.1} parent=51 // pred_check_branch
          %853 = sbr.rel (%p851) target = $region56
        $region55: #{tpu_custom_call.1} parent=51 // pred_region
          %s854 = sand.u32 %s141, 1
          %s855 = scalar_lea.sflag [#allocation6], %s854
          %s856 = sand.u32 %s141, 1
          %s857 = smul.addr %s856, 8
          %s858 = scalar_lea.vmem [#allocation7], %s857
          %859 = dma.done %s855, 128
        $region56: #{tpu_custom_call.1} parent=51 // pred_fallthru
          _
      $region52: #{tpu_custom_call.1} parent=5 // pred_fallthru
        _
    $region6: #{tpu_custom_call.1} parent=1 // loop_footer
      %s21 = sadd.s32 1, %s17
    $region7: #{tpu_custom_call.1} parent=1 // loop_footer_branch
      %16 = sbr.rel target = $region3
    $region8: #{tpu_custom_call.1} parent=1 // loop_exit
      _
    %860 = vsyncpa [#allocation5], 1
    %s861 = scalar_lea.sflag [#allocation5], 1
    %862 = vsyncpa %s861, 1
    %863 = vsyncpa [#allocation6], 1
    %s864 = scalar_lea.sflag [#allocation6], 1
    %865 = vsyncpa %s864, 1

</llo_original>
